<compile_context>
chip_gen: v7x
topology: tpu7x:2x2x1
jax: 0.10.0
libtpu: 0.0.40
codegen_flags: <defaults>
</compile_context>

<pallas_src>
import jax
import jax.numpy as jnp
from jax.experimental import pallas as pl
from jax.experimental.pallas import tpu as pltpu


def _gmf_gather_kernel(u_idx_ref, i_idx_ref,   # (1, TB) int32 index tiles (VMEM)
                       u_tab_ref, i_tab_ref,   # (n_users, D) / (n_items, D) VMEM-resident
                       w_ref,                  # (1, D) linear weight row (VMEM)
                       b_ref,                  # (1,) bias (SMEM)
                       out_ref):               # (TB, 1) output block
    u_idx = u_idx_ref[0, :]                    # (TB,) int32
    i_idx = i_idx_ref[0, :]                    # (TB,) int32

    # Real row gather from the VMEM-resident tables: O(TB*D) work and VMEM.
    ue = jnp.take(u_tab_ref[...], u_idx, axis=0, mode="promise_in_bounds")  # (TB, D)
    ie = jnp.take(i_tab_ref[...], i_idx, axis=0, mode="promise_in_bounds")  # (TB, D)

    # GMF interaction (VPU) + Linear(D, 1) as a weighted minor-axis reduction.
    x = ue * ie                                                    # (TB, D)
    y = jnp.sum(x * w_ref[...], axis=1, keepdims=True) + b_ref[0]  # (TB, 1) f32
    out_ref[...] = y.astype(out_ref.dtype)


def _gmf_loop_gather_kernel(u_idx_ref, i_idx_ref,   # (B_pad,) int32 indices (SMEM)
                            u_tab_ref, i_tab_ref,   # (n_users, D) / (n_items, D) VMEM
                            w_ref,                  # (1, D) weight row (VMEM)
                            b_ref,                  # (1,) bias (SMEM)
                            out_ref,                # (TB, 1) output block
                            ue_buf, ie_buf):        # (TB, D) VMEM scratch
    # Fallback gather: scalar-indexed dynamic row reads from the VMEM tables.
    tb = out_ref.shape[0]
    base = pl.program_id(0) * tb

    def gather_row(r, carry):
        u = u_idx_ref[base + r]
        i = i_idx_ref[base + r]
        ue_buf[pl.ds(r, 1), :] = u_tab_ref[pl.ds(u, 1), :]
        ie_buf[pl.ds(r, 1), :] = i_tab_ref[pl.ds(i, 1), :]
        return carry

    jax.lax.fori_loop(0, tb, gather_row, 0)

    x = ue_buf[...] * ie_buf[...]
    y = jnp.sum(x * w_ref[...], axis=1, keepdims=True) + b_ref[0]
    out_ref[...] = y.astype(out_ref.dtype)


def _round_up(x, m):
    return ((x + m - 1) // m) * m


def gmf_forward(users, items, user_table, item_table, w, b, *, tile_b=1024):
    """GMF forward: squeeze((user_table[users] * item_table[items]) @ w.T + b).

    users, items : int (B,)
    user_table   : (n_users, D)
    item_table   : (n_items, D)
    w            : (1, D)   (PyTorch nn.Linear(D, 1).weight)
    b            : (1,)     (nn.Linear(D, 1).bias)
    returns      : (B,) float32
    """
    B = int(users.shape[0])
    n_users, D = user_table.shape
    n_items, D_i = item_table.shape
    assert D == D_i

    dt_bytes = user_table.dtype.itemsize
    table_bytes = (user_table.size + item_table.size) * dt_bytes
    # VMEM-resident-table path.  Budget against the smallest per-core VMEM
    # (v7x: 64 MiB per TC; with dimension_semantics=("parallel",) each TC
    # holds its own copy of the tables).  Tables are single-buffered; the only
    # other residents are O(tile_b * D) temporaries, so this cap bounds the
    # true footprint.
    assert table_bytes <= 16 * 1024 * 1024, (
        "embedding tables too large for the VMEM-resident gather path")
    # TODO(synk): for larger tables keep them in HBM (memory_space=pl.ANY) and
    # gather rows with a double-buffered pltpu.make_async_copy driven by
    # scalar-prefetched indices.

    # Lane-aligned batch tiling; collapse to a single grid step for small B.
    tile_b = max(128, min(_round_up(int(tile_b), 128), _round_up(B, 128)))
    b_pad = _round_up(B, tile_b)
    pad = b_pad - B
    num_tiles = b_pad // tile_b

    users_p = jnp.pad(users.astype(jnp.int32), (0, pad))   # pad value 0: in bounds
    items_p = jnp.pad(items.astype(jnp.int32), (0, pad))
    users_2d = users_p.reshape(1, b_pad)
    items_2d = items_p.reshape(1, b_pad)

    # Only trivial reshapes of the small weight/bias; the embedding tables are
    # used in their stored (n, D) layout (no per-call full-table transpose).
    # (Folding w into user_table at init would save one (TB, D) VPU multiply,
    # but changes the parameter contract; skipped.)
    w_row = jnp.asarray(w, jnp.float32).reshape(1, D)
    b1 = jnp.asarray(b, jnp.float32).reshape(1)

    # Estimate what is actually resident per grid step (tables single-buffered,
    # index/output blocks double-buffered, gather results + elementwise temps).
    est_bytes = (table_bytes
                 + 2 * (2 * tile_b * 4)      # two index blocks, x2 buffers
                 + 2 * (tile_b * 4)          # output block, x2 buffers
                 + 6 * tile_b * D * 4        # gathered rows + temporaries
                 + 4 * D * 4)
    vmem_limit = int(min(64 * 2 ** 20, max(16 * 2 ** 20, 2 * est_bytes)))

    out_shape = jax.ShapeDtypeStruct((b_pad, 1), jnp.float32)
    out_spec = pl.BlockSpec((tile_b, 1), lambda i: (i, 0))
    idx_spec = pl.BlockSpec((1, tile_b), lambda i: (0, i))
    smem_spec = pl.BlockSpec(memory_space=pltpu.MemorySpace.SMEM)
    compiler_params = pltpu.CompilerParams(
        dimension_semantics=("parallel",),    # independent batch tiles
        vmem_limit_bytes=vmem_limit,
    )

    def resident_specs(single_buffer):
        # Grid-invariant operands (constant index_map): single-buffer them so
        # VMEM does not hold a second, never-used copy of each table.
        kw = dict(pipeline_mode=pl.Buffered(1)) if single_buffer else {}
        return [
            pl.BlockSpec((n_users, D), lambda i: (0, 0), **kw),
            pl.BlockSpec((n_items, D), lambda i: (0, 0), **kw),
            pl.BlockSpec((1, D), lambda i: (0, 0), **kw),
        ]

    def run_vector_gather(single_buffer_tables):
        call = pl.pallas_call(
            _gmf_gather_kernel,
            out_shape=out_shape,
            grid=(num_tiles,),
            in_specs=[idx_spec, idx_spec]
                     + resident_specs(single_buffer_tables)
                     + [smem_spec],
            out_specs=out_spec,
            compiler_params=compiler_params,
        )
        return call(users_2d, items_2d, user_table, item_table, w_row, b1)

    def run_loop_gather():
        call = pl.pallas_call(
            _gmf_loop_gather_kernel,
            out_shape=out_shape,
            grid=(num_tiles,),
            in_specs=[smem_spec, smem_spec] + resident_specs(False) + [smem_spec],
            out_specs=out_spec,
            scratch_shapes=[pltpu.VMEM((tile_b, D), user_table.dtype),
                            pltpu.VMEM((tile_b, D), item_table.dtype)],
            compiler_params=compiler_params,
        )
        return call(users_p, items_p, user_table, item_table, w_row, b1)

    # Preferred: vectorized in-kernel gather with single-buffered tables.
    # Fallbacks: (a) same kernel without Buffered(1); (b) scalar row-copy
    # gather, which is guaranteed to lower on all Mosaic versions.
    attempts = (
        lambda: run_vector_gather(True),
        lambda: run_vector_gather(False),
        run_loop_gather,
    )
    out = None
    last_err = None
    for attempt in attempts:
        try:
            out = attempt()
            break
        except Exception as e:   # fall back on lowering/compile failures
            last_err = e
    if out is None:
        raise last_err

    return out[:B, 0]


def init_gmf_params(key, n_users, n_items, embedding_dim):
    """Deterministic parameter init matching GMF.init_weight()."""
    k_u, k_i, k_w = jax.random.split(key, 3)
    user_table = 0.01 * jax.random.normal(k_u, (n_users, embedding_dim), jnp.float32)
    item_table = 0.01 * jax.random.normal(k_i, (n_items, embedding_dim), jnp.float32)
    # xavier_uniform_ for Linear(embedding_dim, 1): bound = sqrt(6/(fan_in+fan_out))
    bound = (6.0 / (embedding_dim + 1)) ** 0.5
    w = jax.random.uniform(k_w, (1, embedding_dim), jnp.float32, -bound, bound)
    b = jnp.zeros((1,), jnp.float32)
    return user_table, item_table, w, b


if __name__ == "__main__":
    n_users, n_items, embedding_dim = 50, 40, 32
    batch = 8

    key = jax.random.PRNGKey(0)
    k_params, k_u_idx, k_i_idx = jax.random.split(key, 3)

    user_table, item_table, w, b = init_gmf_params(
        k_params, n_users, n_items, embedding_dim)

    users = jax.random.randint(k_u_idx, (batch,), 0, n_users, dtype=jnp.int32)
    items = jax.random.randint(k_i_idx, (batch,), 0, n_items, dtype=jnp.int32)

    out = gmf_forward(users, items, user_table, item_table, w, b)
    out = jax.block_until_ready(out)

    # Pure-JAX reference check
    ref = (user_table[users] * item_table[items]) @ w[0] + b[0]
    assert out.shape == (batch,)
    assert jnp.allclose(out, ref, atol=1e-5, rtol=1e-4), (out, ref)

    print("KERNEL_OK")
</pallas_src>

<mosaic_0001>
module attributes {stable_mosaic.version = 11 : i64} {
  func.func @_gmf_loop_gather_kernel(%arg0: i32, %arg1: memref<128xi32, #tpu.memory_space<smem>>, %arg2: memref<128xi32, #tpu.memory_space<smem>>, %arg3: memref<50x32xf32, #tpu.memory_space<vmem>>, %arg4: memref<40x32xf32, #tpu.memory_space<vmem>>, %arg5: memref<1x32xf32, #tpu.memory_space<vmem>>, %arg6: memref<1xf32, #tpu.memory_space<smem>>, %arg7: memref<128x1xf32, #tpu.memory_space<vmem>>, %arg8: memref<128x32xf32, #tpu.memory_space<vmem>>, %arg9: memref<128x32xf32, #tpu.memory_space<vmem>>) attributes {dimension_semantics = [#tpu.dimension_semantics<parallel>], iteration_bounds = array<i64: 1>, scalar_prefetch = 0 : i64, scratch_operands = 2 : i64, tpu.core_type = #tpu.core_type<tc>, window_params = [{transform_indices = @transform_0, window_bounds = array<i64: 128>}, {transform_indices = @transform_1, window_bounds = array<i64: 128>}, {pipeline_mode = #tpu.pipeline_mode<synchronous>, transform_indices = @transform_2, window_bounds = array<i64: 50, 32>}, {pipeline_mode = #tpu.pipeline_mode<synchronous>, transform_indices = @transform_3, window_bounds = array<i64: 40, 32>}, {pipeline_mode = #tpu.pipeline_mode<synchronous>, transform_indices = @transform_4, window_bounds = array<i64: 1, 32>}, {transform_indices = @transform_5, window_bounds = array<i64: 1>}, {transform_indices = @transform_6, window_bounds = array<i64: 128, 1>}]} {
    %c128_i32 = arith.constant 128 : i32
    %0 = arith.muli %arg0, %c128_i32 : i32
    %c0_i32 = arith.constant 0 : i32
    %c128_i32_0 = arith.constant 128 : i32
    %1 = arith.addi %c0_i32, %c128_i32_0 : i32
    %c1_i32 = arith.constant 1 : i32
    scf.for %arg10 = %c0_i32 to %1 step %c1_i32  : i32 {
      %14 = arith.addi %0, %arg10 : i32
      %15 = arith.index_cast %14 : i32 to index
      %16 = memref.load %arg1[%15] : memref<128xi32, #tpu.memory_space<smem>>
      %17 = arith.addi %0, %arg10 : i32
      %18 = arith.index_cast %17 : i32 to index
      %19 = memref.load %arg2[%18] : memref<128xi32, #tpu.memory_space<smem>>
      %20 = arith.index_cast %16 : i32 to index
      %c0_10 = arith.constant 0 : index
      %21 = vector.load %arg3[%20, %c0_10] : memref<50x32xf32, #tpu.memory_space<vmem>>, vector<1x32xf32>
      %22 = arith.index_cast %arg10 : i32 to index
      %c0_11 = arith.constant 0 : index
      %23 = vector.load %arg8[%22, %c0_11] : memref<128x32xf32, #tpu.memory_space<vmem>>, vector<1x32xf32>
      tpu.vector_store %arg8[%22, %c0_11], %21 {strides = array<i32>} : memref<128x32xf32, #tpu.memory_space<vmem>>, vector<1x32xf32>,
      %24 = arith.index_cast %19 : i32 to index
      %c0_12 = arith.constant 0 : index
      %25 = vector.load %arg4[%24, %c0_12] : memref<40x32xf32, #tpu.memory_space<vmem>>, vector<1x32xf32>
      %26 = arith.index_cast %arg10 : i32 to index
      %c0_13 = arith.constant 0 : index
      %27 = vector.load %arg9[%26, %c0_13] : memref<128x32xf32, #tpu.memory_space<vmem>>, vector<1x32xf32>
      tpu.vector_store %arg9[%26, %c0_13], %25 {strides = array<i32>} : memref<128x32xf32, #tpu.memory_space<vmem>>, vector<1x32xf32>,
    }
    %c128_i32_1 = arith.constant 128 : i32
    %c0 = arith.constant 0 : index
    %c0_2 = arith.constant 0 : index
    %2 = vector.load %arg8[%c0, %c0_2] : memref<128x32xf32, #tpu.memory_space<vmem>>, vector<128x32xf32>
    %c0_3 = arith.constant 0 : index
    %c0_4 = arith.constant 0 : index
    %3 = vector.load %arg9[%c0_3, %c0_4] : memref<128x32xf32, #tpu.memory_space<vmem>>, vector<128x32xf32>
    %4 = arith.mulf %2, %3 : vector<128x32xf32>
    %c0_5 = arith.constant 0 : index
    %c0_6 = arith.constant 0 : index
    %5 = vector.load %arg5[%c0_5, %c0_6] : memref<1x32xf32, #tpu.memory_space<vmem>>, vector<1x32xf32>
    %6 = vector.broadcast %5 : vector<1x32xf32> to vector<128x32xf32>
    %7 = arith.mulf %4, %6 : vector<128x32xf32>
    %cst = arith.constant dense<0.000000e+00> : vector<128xf32>
    %8 = vector.multi_reduction <add>, %7, %cst [1] : vector<128x32xf32> to vector<128xf32>
    %9 = vector.shape_cast %8 : vector<128xf32> to vector<128x1xf32>
    %c0_7 = arith.constant 0 : index
    %10 = memref.load %arg6[%c0_7] : memref<1xf32, #tpu.memory_space<smem>>
    %11 = vector.broadcast %10 : f32 to vector<128x1xf32>
    %12 = arith.addf %9, %11 : vector<128x1xf32>
    %c0_8 = arith.constant 0 : index
    %c0_9 = arith.constant 0 : index
    %13 = vector.load %arg7[%c0_8, %c0_9] : memref<128x1xf32, #tpu.memory_space<vmem>>, vector<128x1xf32>
    tpu.vector_store %arg7[%c0_8, %c0_9], %12 {strides = array<i32>} : memref<128x1xf32, #tpu.memory_space<vmem>>, vector<128x1xf32>,
    return
  }
  func.func @transform_0(%arg0: i32) -> i32 {
    %c0_i32 = arith.constant 0 : i32
    %c0_i32_0 = arith.constant 0 : i32
    return %c0_i32 : i32
  }
  func.func @transform_1(%arg0: i32) -> i32 {
    %c0_i32 = arith.constant 0 : i32
    %c0_i32_0 = arith.constant 0 : i32
    return %c0_i32 : i32
  }
  func.func @transform_2(%arg0: i32) -> (i32, i32) {
    %c0_i32 = arith.constant 0 : i32
    %c0_i32_0 = arith.constant 0 : i32
    %c0_i32_1 = arith.constant 0 : i32
    return %c0_i32, %c0_i32_0 : i32, i32
  }
  func.func @transform_3(%arg0: i32) -> (i32, i32) {
    %c0_i32 = arith.constant 0 : i32
    %c0_i32_0 = arith.constant 0 : i32
    %c0_i32_1 = arith.constant 0 : i32
    return %c0_i32, %c0_i32_0 : i32, i32
  }
  func.func @transform_4(%arg0: i32) -> (i32, i32) {
    %c0_i32 = arith.constant 0 : i32
    %c0_i32_0 = arith.constant 0 : i32
    %c0_i32_1 = arith.constant 0 : i32
    return %c0_i32, %c0_i32_0 : i32, i32
  }
  func.func @transform_5(%arg0: i32) -> i32 {
    %c0_i32 = arith.constant 0 : i32
    %c0_i32_0 = arith.constant 0 : i32
    return %c0_i32 : i32
  }
  func.func @transform_6(%arg0: i32) -> (i32, i32) {
    %c0_i32 = arith.constant 0 : i32
    %c0_i32_0 = arith.constant 0 : i32
    return %arg0, %c0_i32 : i32, i32
  }
}

</mosaic_0001>

<llo_original>
// kernel: tpu_custom_call.1
$region0: #{tpu_custom_call.1}
  #allocation0 [shape = 'u32[]', space=smem, size = 0x4, offset = 0x4, fixed_abs, tag = 'smem constant byte address 0x4 - core index']
  #allocation1 [shape = 'u32[144,128]{1,0:T(1,128)}', space=vmem, size = 0x12000, scoped, tag = 'internal scratch']
  #allocation2 [shape = 'f32[128,32]{1,0:T(8,128)}', space=vmem, size = 0x10000, scoped, tag = 'scratch operand']
  #allocation3 [shape = 'f32[128,32]{1,0:T(8,128)}', space=vmem, size = 0x10000, scoped, tag = 'scratch operand']
  #allocation4 [shape = 'f32[1]{0:T(128)S(6)}', space=smem, size = 0x200, scoped, tag = 'scoped memory for tpu_custom_call.1']
  %s0 = inlined_call_operand.vmem [shape: s32[128], index: 0, kind: input, shape index: {}]
  %s1 = inlined_call_operand.vmem [shape: s32[128], index: 1, kind: input, shape index: {}]
  %s2 = inlined_call_operand.vmem [shape: f32[50,32], index: 2, kind: input, shape index: {}]
  %s3 = inlined_call_operand.vmem [shape: f32[40,32], index: 3, kind: input, shape index: {}]
  %s4 = inlined_call_operand.vmem [shape: f32[1,32], index: 4, kind: input, shape index: {}]
  %s5 = inlined_call_operand.<no memory space> [shape: f32[1], index: 5, kind: input, shape index: {}]
  %s6 = inlined_call_operand.vmem [shape: f32[128,1], index: 6, kind: output, shape index: {}]
  %s7 = sld [smem:[#allocation0]]
  $region49: #{tpu_custom_call.1} parent=0
    _
  %s9 = ssub.s32 1, %s7
  %s10 = scalar_select 0, %s9, %s7
  %11 = sst [smem:[#allocation4]] %s5
  $region1: #{tpu_custom_call.1} parent=0
    #allocation5 [shape = 'u8[512]{0}', space=smem, size = 0x200, scoped, tag = 'input window, operand 0, single buffered']
    #allocation6 [shape = 's32[1]{0}', space=sflag, size = 0x4, scoped, tag = 'scoped memory for tpu_custom_call.1']
    #allocation7 [shape = 'u8[512]{0}', space=smem, size = 0x200, scoped, tag = 'input window, operand 1, single buffered']
    #allocation8 [shape = 's32[1]{0}', space=sflag, size = 0x4, scoped, tag = 'scoped memory for tpu_custom_call.1']
    %12 = vsyncpa [#allocation6], 0
    %13 = vsyncpa [#allocation8], 0
    // Predicated region
    $region2: #{tpu_custom_call.1} parent=1 // pred_check
      _
    $region3: #{tpu_custom_call.1} parent=1 // pred_check_branch
      %15 = sbr.rel (0) target = $region5
    $region4: #{tpu_custom_call.1} parent=1 // pred_region
      %s17 = ssub.s32 16, 16
      %18 = vsyncadd [#allocation6], %s17
      %s20 = sshll.u32 %s0, 4
      %s21 = int_to_ptr.vmem [resolvable:$true] %s20
      %23 = dma.vmem_to_smem %s21, 16, [#allocation5], [#allocation6]
    $region5: #{tpu_custom_call.1} parent=1 // pred_fallthru
      _
    // Predicated region
    $region6: #{tpu_custom_call.1} parent=1 // pred_check
      _
    $region7: #{tpu_custom_call.1} parent=1 // pred_check_branch
      %25 = sbr.rel (0) target = $region9
    $region8: #{tpu_custom_call.1} parent=1 // pred_region
      %s27 = ssub.s32 16, 16
      %28 = vsyncadd [#allocation8], %s27
      %s30 = sshll.u32 %s1, 4
      %s31 = int_to_ptr.vmem [resolvable:$true] %s30
      %33 = dma.vmem_to_smem %s31, 16, [#allocation7], [#allocation8]
    $region9: #{tpu_custom_call.1} parent=1 // pred_fallthru
      _
    // Predicated region
    $region10: #{tpu_custom_call.1} parent=1 // pred_check
      _
    $region11: #{tpu_custom_call.1} parent=1 // pred_check_branch
      %35 = sbr.rel (0) target = $region13
    $region12: #{tpu_custom_call.1} parent=1 // pred_region
      _
    $region13: #{tpu_custom_call.1} parent=1 // pred_fallthru
      _
    // Predicated region
    $region14: #{tpu_custom_call.1} parent=1 // pred_check
      _
    $region15: #{tpu_custom_call.1} parent=1 // pred_check_branch
      %37 = sbr.rel (0) target = $region17
    $region16: #{tpu_custom_call.1} parent=1 // pred_region
      _
    $region17: #{tpu_custom_call.1} parent=1 // pred_fallthru
      _
    // Predicated region
    $region18: #{tpu_custom_call.1} parent=1 // pred_check
      _
    $region19: #{tpu_custom_call.1} parent=1 // pred_check_branch
      %39 = sbr.rel (0) target = $region21
    $region20: #{tpu_custom_call.1} parent=1 // pred_region
      _
    $region21: #{tpu_custom_call.1} parent=1 // pred_fallthru
      _
    // Predicated region
    $region22: #{tpu_custom_call.1} parent=1 // pred_check
      _
    $region23: #{tpu_custom_call.1} parent=1 // pred_check_branch
      %41 = sbr.rel (0) target = $region25
    $region24: #{tpu_custom_call.1} parent=1 // pred_region
      _
    $region25: #{tpu_custom_call.1} parent=1 // pred_fallthru
      _
    // Predicated region
    $region26: #{tpu_custom_call.1} parent=1 // pred_check
      _
    $region27: #{tpu_custom_call.1} parent=1 // pred_check_branch
      %43 = sbr.rel (0) target = $region29
    $region28: #{tpu_custom_call.1} parent=1 // pred_region
      %44 = dma.done [#allocation6], 16
    $region29: #{tpu_custom_call.1} parent=1 // pred_fallthru
      _
    // Predicated region
    $region30: #{tpu_custom_call.1} parent=1 // pred_check
      _
    $region31: #{tpu_custom_call.1} parent=1 // pred_check_branch
      %46 = sbr.rel (0) target = $region33
    $region32: #{tpu_custom_call.1} parent=1 // pred_region
      %47 = dma.done [#allocation8], 16
    $region33: #{tpu_custom_call.1} parent=1 // pred_fallthru
      _
    %48 = sfence
    %s49 = smul.u32 0, 128
    loop: start=0, step=1, limit=128
    $region34: #{tpu_custom_call.1} parent=1 // loop_pre_header
      _
    $region35: #{tpu_custom_call.1} parent=1 // loop_header
      %s51 = sphi 0, %s55
      %p52 = scmp.ge.s32.totalorder %s51, 128
    $region36: #{tpu_custom_call.1} parent=1 // loop_header_branch
      %54 = sbr.rel (%p52) target = $region40
    $region37: #{tpu_custom_call.1} parent=1 // loop_body
      %s56 = sadd.s32 %s49, %s51
      %s57 = sld [smem:[#allocation5 + %s56]]
      %s58 = sld [smem:[#allocation7 + %s56]]
      %s59 = scalar_lea.vmem %s2, %s57
      %v60 = vld [vmem:[%s59] sm:$0x1]
      %s61 = scalar_lea.vmem [#allocation2], %s51
      %vm62 = vcmask 253952
      %63 = vst.msk [vmem:[%s61] sm:$0x1] %vm62, %v60
      %s64 = scalar_lea.vmem %s3, %s58
      %v65 = vld [vmem:[%s64] sm:$0x1]
      %s66 = scalar_lea.vmem [#allocation3], %s51
      %67 = vst.msk [vmem:[%s66] sm:$0x1] %vm62, %v65
    $region38: #{tpu_custom_call.1} parent=1 // loop_footer
      %s55 = sadd.s32 1, %s51
    $region39: #{tpu_custom_call.1} parent=1 // loop_footer_branch
      %50 = sbr.rel target = $region35
    $region40: #{tpu_custom_call.1} parent=1 // loop_exit
      _
    %v68 = vld [vmem:[#allocation2] sm:$0xff]
    %v69 = vld [vmem:[#allocation2 + $0x8] sm:$0xff]
    %v70 = vld [vmem:[#allocation2 + $0x10] sm:$0xff]
    %v71 = vld [vmem:[#allocation2 + $0x18] sm:$0xff]
    %v72 = vld [vmem:[#allocation2 + $0x20] sm:$0xff]
    %v73 = vld [vmem:[#allocation2 + $0x28] sm:$0xff]
    %v74 = vld [vmem:[#allocation2 + $0x30] sm:$0xff]
    %v75 = vld [vmem:[#allocation2 + $0x38] sm:$0xff]
    %v76 = vld [vmem:[#allocation2 + $0x40] sm:$0xff]
    %v77 = vld [vmem:[#allocation2 + $0x48] sm:$0xff]
    %v78 = vld [vmem:[#allocation2 + $0x50] sm:$0xff]
    %v79 = vld [vmem:[#allocation2 + $0x58] sm:$0xff]
    %v80 = vld [vmem:[#allocation2 + $0x60] sm:$0xff]
    %v81 = vld [vmem:[#allocation2 + $0x68] sm:$0xff]
    %v82 = vld [vmem:[#allocation2 + $0x70] sm:$0xff]
    %v83 = vld [vmem:[#allocation2 + $0x78] sm:$0xff]
    %v84 = vld [vmem:[#allocation3] sm:$0xff]
    %v85 = vld [vmem:[#allocation3 + $0x8] sm:$0xff]
    %v86 = vld [vmem:[#allocation3 + $0x10] sm:$0xff]
    %v87 = vld [vmem:[#allocation3 + $0x18] sm:$0xff]
    %v88 = vld [vmem:[#allocation3 + $0x20] sm:$0xff]
    %v89 = vld [vmem:[#allocation3 + $0x28] sm:$0xff]
    %v90 = vld [vmem:[#allocation3 + $0x30] sm:$0xff]
    %v91 = vld [vmem:[#allocation3 + $0x38] sm:$0xff]
    %v92 = vld [vmem:[#allocation3 + $0x40] sm:$0xff]
    %v93 = vld [vmem:[#allocation3 + $0x48] sm:$0xff]
    %v94 = vld [vmem:[#allocation3 + $0x50] sm:$0xff]
    %v95 = vld [vmem:[#allocation3 + $0x58] sm:$0xff]
    %v96 = vld [vmem:[#allocation3 + $0x60] sm:$0xff]
    %v97 = vld [vmem:[#allocation3 + $0x68] sm:$0xff]
    %v98 = vld [vmem:[#allocation3 + $0x70] sm:$0xff]
    %v99 = vld [vmem:[#allocation3 + $0x78] sm:$0xff]
    %v100 = vmul.f32 %v68, %v84
    %v101 = vmul.f32 %v69, %v85
    %v102 = vmul.f32 %v70, %v86
    %v103 = vmul.f32 %v71, %v87
    %v104 = vmul.f32 %v72, %v88
    %v105 = vmul.f32 %v73, %v89
    %v106 = vmul.f32 %v74, %v90
    %v107 = vmul.f32 %v75, %v91
    %v108 = vmul.f32 %v76, %v92
    %v109 = vmul.f32 %v77, %v93
    %v110 = vmul.f32 %v78, %v94
    %v111 = vmul.f32 %v79, %v95
    %v112 = vmul.f32 %v80, %v96
    %v113 = vmul.f32 %v81, %v97
    %v114 = vmul.f32 %v82, %v98
    %v115 = vmul.f32 %v83, %v99
    %v116 = vld [vmem:[%s4] sm:$0x1]
    %v118 = vlaneseq
    %v119 = vshrl.u32 %v118, 7
    %v120 = vsub.s32 0, %v119
    %v121 = vrot.slane %v116, %v120
    %v123 = vmul.f32 %v100, %v121
    %v124 = vmul.f32 %v101, %v121
    %v125 = vmul.f32 %v102, %v121
    %v126 = vmul.f32 %v103, %v121
    %v127 = vmul.f32 %v104, %v121
    %v128 = vmul.f32 %v105, %v121
    %v129 = vmul.f32 %v106, %v121
    %v130 = vmul.f32 %v107, %v121
    %v131 = vmul.f32 %v108, %v121
    %v132 = vmul.f32 %v109, %v121
    %v133 = vmul.f32 %v110, %v121
    %v134 = vmul.f32 %v111, %v121
    %v135 = vmul.f32 %v112, %v121
    %v136 = vmul.f32 %v113, %v121
    %v137 = vmul.f32 %v114, %v121
    %v138 = vmul.f32 %v115, %v121
    %vm139 = vcmask 261120
    %v140 = vsel %vm139, %v123, 0.0
    %141 = vadd.xlane.f32.xlu0 %v140
    %v142 = vpop.xlane.xlu0 %141
    %v143 = vsel %vm139, %v124, 0.0
    %144 = vadd.xlane.f32.xlu0 %v143
    %v145 = vpop.xlane.xlu0 %144
    %v146 = vsel %vm139, %v125, 0.0
    %147 = vadd.xlane.f32.xlu0 %v146
    %v148 = vpop.xlane.xlu0 %147
    %v149 = vsel %vm139, %v126, 0.0
    %150 = vadd.xlane.f32.xlu0 %v149
    %v151 = vpop.xlane.xlu0 %150
    %v152 = vsel %vm139, %v127, 0.0
    %153 = vadd.xlane.f32.xlu0 %v152
    %v154 = vpop.xlane.xlu0 %153
    %v155 = vsel %vm139, %v128, 0.0
    %156 = vadd.xlane.f32.xlu0 %v155
    %v157 = vpop.xlane.xlu0 %156
    %v158 = vsel %vm139, %v129, 0.0
    %159 = vadd.xlane.f32.xlu0 %v158
    %v160 = vpop.xlane.xlu0 %159
    %v161 = vsel %vm139, %v130, 0.0
    %162 = vadd.xlane.f32.xlu0 %v161
    %v163 = vpop.xlane.xlu0 %162
    %v164 = vsel %vm139, %v131, 0.0
    %165 = vadd.xlane.f32.xlu0 %v164
    %v166 = vpop.xlane.xlu0 %165
    %v167 = vsel %vm139, %v132, 0.0
    %168 = vadd.xlane.f32.xlu0 %v167
    %v169 = vpop.xlane.xlu0 %168
    %v170 = vsel %vm139, %v133, 0.0
    %171 = vadd.xlane.f32.xlu0 %v170
    %v172 = vpop.xlane.xlu0 %171
    %v173 = vsel %vm139, %v134, 0.0
    %174 = vadd.xlane.f32.xlu0 %v173
    %v175 = vpop.xlane.xlu0 %174
    %v176 = vsel %vm139, %v135, 0.0
    %177 = vadd.xlane.f32.xlu0 %v176
    %v178 = vpop.xlane.xlu0 %177
    %v179 = vsel %vm139, %v136, 0.0
    %180 = vadd.xlane.f32.xlu0 %v179
    %v181 = vpop.xlane.xlu0 %180
    %v182 = vsel %vm139, %v137, 0.0
    %183 = vadd.xlane.f32.xlu0 %v182
    %v184 = vpop.xlane.xlu0 %183
    %v185 = vsel %vm139, %v138, 0.0
    %186 = vadd.xlane.f32.xlu0 %v185
    %v187 = vpop.xlane.xlu0 %186
    %s188 = sld [smem:[#allocation4]]
    %v189 = vstv %s188
    %v190 = vadd.f32 %v142, %v189
    %v191 = vadd.f32 %v145, %v189
    %v192 = vadd.f32 %v148, %v189
    %v193 = vadd.f32 %v151, %v189
    %v194 = vadd.f32 %v154, %v189
    %v195 = vadd.f32 %v157, %v189
    %v196 = vadd.f32 %v160, %v189
    %v197 = vadd.f32 %v163, %v189
    %v198 = vadd.f32 %v166, %v189
    %v199 = vadd.f32 %v169, %v189
    %v200 = vadd.f32 %v172, %v189
    %v201 = vadd.f32 %v175, %v189
    %v202 = vadd.f32 %v178, %v189
    %v203 = vadd.f32 %v181, %v189
    %v204 = vadd.f32 %v184, %v189
    %v205 = vadd.f32 %v187, %v189
    %vm206 = vcmask 7168
    %207 = vst.msk [vmem:[%s6] sm:$0xff] %vm206, %v190
    %208 = vst.msk [vmem:[%s6 + $0x8] sm:$0xff] %vm206, %v191
    %209 = vst.msk [vmem:[%s6 + $0x10] sm:$0xff] %vm206, %v192
    %210 = vst.msk [vmem:[%s6 + $0x18] sm:$0xff] %vm206, %v193
    %211 = vst.msk [vmem:[%s6 + $0x20] sm:$0xff] %vm206, %v194
    %212 = vst.msk [vmem:[%s6 + $0x28] sm:$0xff] %vm206, %v195
    %213 = vst.msk [vmem:[%s6 + $0x30] sm:$0xff] %vm206, %v196
    %214 = vst.msk [vmem:[%s6 + $0x38] sm:$0xff] %vm206, %v197
    %215 = vst.msk [vmem:[%s6 + $0x40] sm:$0xff] %vm206, %v198
    %216 = vst.msk [vmem:[%s6 + $0x48] sm:$0xff] %vm206, %v199
    %217 = vst.msk [vmem:[%s6 + $0x50] sm:$0xff] %vm206, %v200
    %218 = vst.msk [vmem:[%s6 + $0x58] sm:$0xff] %vm206, %v201
    %219 = vst.msk [vmem:[%s6 + $0x60] sm:$0xff] %vm206, %v202
    %220 = vst.msk [vmem:[%s6 + $0x68] sm:$0xff] %vm206, %v203
    %221 = vst.msk [vmem:[%s6 + $0x70] sm:$0xff] %vm206, %v204
    %222 = vst.msk [vmem:[%s6 + $0x78] sm:$0xff] %vm206, %v205
    // Predicated region
    $region41: #{tpu_custom_call.1} parent=1 // pred_check
      _
    $region42: #{tpu_custom_call.1} parent=1 // pred_check_branch
      %224 = sbr.rel (0) target = $region44
    $region43: #{tpu_custom_call.1} parent=1 // pred_region
      _
    $region44: #{tpu_custom_call.1} parent=1 // pred_fallthru
      _
    // Predicated region
    $region45: #{tpu_custom_call.1} parent=1 // pred_check
      _
    $region46: #{tpu_custom_call.1} parent=1 // pred_check_branch
      %226 = sbr.rel (0) target = $region48
    $region47: #{tpu_custom_call.1} parent=1 // pred_region
      _
    $region48: #{tpu_custom_call.1} parent=1 // pred_fallthru
      _
    %227 = vsyncpa [#allocation6], 1
    %228 = vsyncpa [#allocation8], 1

</llo_original>
